<compile_context>
chip_gen: v5e
topology: v5e:2x2
jax: 0.10.0
libtpu: 0.0.40
codegen_flags: <defaults>
</compile_context>

<pallas_src>
from functools import partial

import jax
import jax.numpy as jnp
from jax.experimental import pallas as pl
from jax.experimental.pallas import tpu as pltpu  # noqa: F401  (TPU backend / memory spaces)


# ----------------------------------------------------------------------------
# Fused StaGNN kernel.
# ----------------------------------------------------------------------------
def _elu(v):
    # ELU(alpha=1): v if v > 0 else exp(v) - 1   (exp argument clamped <= 0)
    return jnp.where(v > 0, v, jnp.exp(jnp.minimum(v, 0.0)) - 1.0)


def _stagnn_kernel(x_ref, ea_ref, u_ref, row_ref, col_ref, colT_ref,
                   w1a_ref, w1b_ref, w1c_ref, b1_ref,
                   w2a_ref, w2b_ref, w2c_ref, b2_ref,
                   o_ref):
    f32 = jnp.float32
    N = x_ref.shape[0]
    E = ea_ref.shape[0]

    x = x_ref[...]                                                    # (N, node_h)

    # --- edge MLP, with node projections hoisted to per-node matmuls ---------
    xa = jnp.dot(x, w1a_ref[...], preferred_element_type=f32)          # (N, g)
    xb = jnp.dot(x, w1b_ref[...], preferred_element_type=f32)          # (N, g)

    # one-hot gather matrices: g_row[e, n] = (row[e] == n), g_col likewise
    n_iota = jax.lax.broadcasted_iota(jnp.int32, (E, N), 1)            # (E, N)
    g_row = (n_iota == row_ref[...]).astype(f32)                       # (E, N)
    g_col = (n_iota == col_ref[...]).astype(f32)                       # (E, N)

    msg = (jnp.dot(g_row, xa, preferred_element_type=f32)              # xa[row]
           + jnp.dot(g_col, xb, preferred_element_type=f32)            # xb[col]
           + jnp.dot(ea_ref[...], w1c_ref[...], preferred_element_type=f32)
           + b1_ref[...])                                              # (E, g)
    msg = _elu(msg)

    # --- scatter_mean over destination nodes (col) as one-hot matmul ---------
    e_iota = jax.lax.broadcasted_iota(jnp.int32, (N, E), 0)            # (N, E)
    a_scat = (e_iota == colT_ref[...]).astype(f32)                     # (N, E)
    sums = jnp.dot(a_scat, msg, preferred_element_type=f32)            # (N, g)
    deg = jnp.sum(a_scat, axis=-1, keepdims=True)                      # (N, 1)
    agg = sums / jnp.maximum(deg, 1.0)                                 # mean; 0 if no in-edges

    # --- node MLP 2 (concat decomposed into three matmuls) -------------------
    y = (jnp.dot(x, w2a_ref[...], preferred_element_type=f32)
         + jnp.dot(agg, w2b_ref[...], preferred_element_type=f32)
         + jnp.dot(u_ref[...], w2c_ref[...], preferred_element_type=f32)
         + b2_ref[...])                                                # (N, g)
    o_ref[...] = _elu(y).astype(o_ref.dtype)


# ----------------------------------------------------------------------------
# Python wrapper (jitted end-to-end so all prep fuses around the kernel).
# ----------------------------------------------------------------------------
@partial(jax.jit, static_argnames=("sta_num",))
def stagnn_forward(params, x, edge_index, edge_attr, u, sta_num):
    """x: (N, node_h), edge_index: (2, E) int, edge_attr: (E, edge_h),
    u: (..., u_h) globals (tiled `sta_num` times, PyTorch .repeat semantics).
    Returns (N, gnn_h)."""
    N, node_h = x.shape
    E, edge_h = edge_attr.shape
    gnn_h = params["b1"].shape[-1]

    # globals: reshape(-1, u_h) then tile sta_num times along rows (torch .repeat)
    u2 = u.reshape(-1, u.shape[-1])
    u_rep = jnp.tile(u2, (sta_num, 1)).astype(jnp.float32)             # (N, u_h)
    assert u_rep.shape[0] == N, "sta_num * num_globals must equal number of nodes"
    u_h = u_rep.shape[-1]

    row = edge_index[0].astype(jnp.int32)
    col = edge_index[1].astype(jnp.int32)
    row_e1 = row.reshape(E, 1)
    col_e1 = col.reshape(E, 1)
    col_1e = col.reshape(1, E)

    # split the concatenated-Linear weights so the kernel never concatenates
    w1, b1 = params["w1"], params["b1"]          # (gnn_h, 2*node_h+edge_h), (gnn_h,)
    w1a = jnp.transpose(w1[:, :node_h])                                # (node_h, g)
    w1b = jnp.transpose(w1[:, node_h:2 * node_h])                      # (node_h, g)
    w1c = jnp.transpose(w1[:, 2 * node_h:])                            # (edge_h, g)
    w2, b2 = params["w2"], params["b2"]          # (gnn_h, node_h+gnn_h+u_h), (gnn_h,)
    w2a = jnp.transpose(w2[:, :node_h])                                # (node_h, g)
    w2b = jnp.transpose(w2[:, node_h:node_h + gnn_h])                  # (gnn_h, g)
    w2c = jnp.transpose(w2[:, node_h + gnn_h:])                        # (u_h, g)

    full = lambda shape: pl.BlockSpec(shape, lambda: tuple(0 for _ in shape))

    return pl.pallas_call(
        _stagnn_kernel,
        out_shape=jax.ShapeDtypeStruct((N, gnn_h), jnp.float32),
        in_specs=[
            full((N, node_h)),          # x
            full((E, edge_h)),          # edge_attr
            full((N, u_h)),             # tiled globals
            full((E, 1)),               # row indices
            full((E, 1)),               # col indices (gather orientation)
            full((1, E)),               # col indices (scatter orientation)
            full((node_h, gnn_h)),      # W1a
            full((node_h, gnn_h)),      # W1b
            full((edge_h, gnn_h)),      # W1c
            full((1, gnn_h)),           # b1
            full((node_h, gnn_h)),      # W2a
            full((gnn_h, gnn_h)),       # W2b
            full((u_h, gnn_h)),         # W2c
            full((1, gnn_h)),           # b2
        ],
        out_specs=full((N, gnn_h)),
    )(x.astype(jnp.float32), edge_attr.astype(jnp.float32), u_rep,
      row_e1, col_e1, col_1e,
      w1a, w1b, w1c, b1.reshape(1, gnn_h),
      w2a, w2b, w2c, b2.reshape(1, gnn_h))


# ----------------------------------------------------------------------------
# PyTorch-style parameter init (Linear default: U(-1/sqrt(fan_in), 1/sqrt(fan_in))).
# ----------------------------------------------------------------------------
def init_params(key, node_h, edge_h, gnn_h, u_h):
    in1 = 2 * node_h + edge_h
    in2 = node_h + gnn_h + u_h
    k1 = 1.0 / jnp.sqrt(jnp.float32(in1))
    k2 = 1.0 / jnp.sqrt(jnp.float32(in2))
    key, a, b, c, d = jax.random.split(key, 5)
    return {
        "w1": jax.random.uniform(a, (gnn_h, in1), jnp.float32, -k1, k1),
        "b1": jax.random.uniform(b, (gnn_h,), jnp.float32, -k1, k1),
        "w2": jax.random.uniform(c, (gnn_h, in2), jnp.float32, -k2, k2),
        "b2": jax.random.uniform(d, (gnn_h,), jnp.float32, -k2, k2),
    }


# ----------------------------------------------------------------------------
# Pure-JAX reference (for correctness check only).
# ----------------------------------------------------------------------------
def _ref_forward(params, x, edge_index, edge_attr, u, sta_num):
    u2 = u.reshape(-1, u.shape[-1])
    u_rep = jnp.tile(u2, (sta_num, 1))
    row, col = edge_index[0], edge_index[1]
    feat = jnp.concatenate([x[row], x[col], edge_attr], axis=1)
    h = _elu(feat @ params["w1"].T + params["b1"])
    N = x.shape[0]
    sums = jax.ops.segment_sum(h, col, num_segments=N)
    cnt = jax.ops.segment_sum(jnp.ones((h.shape[0],), jnp.float32), col, num_segments=N)
    agg = sums / jnp.maximum(cnt, 1.0)[:, None]
    z = jnp.concatenate([x, agg, u_rep], axis=1)
    return _elu(z @ params["w2"].T + params["b2"])


if __name__ == "__main__":
    node_h, edge_h, gnn_h, u_h = 16, 8, 32, 4
    N, E = 16, 48
    sta_num = N                      # one global-feature row tiled over all N stations

    key = jax.random.PRNGKey(0)
    key, kx, ke, ku, kr, kc = jax.random.split(key, 6)
    x = jax.random.normal(kx, (N, node_h), jnp.float32)
    edge_attr = jax.random.normal(ke, (E, edge_h), jnp.float32)
    u = jax.random.normal(ku, (1, u_h), jnp.float32)
    row = jax.random.randint(kr, (E,), 0, N, jnp.int32)
    col = jax.random.randint(kc, (E,), 0, N, jnp.int32)
    edge_index = jnp.stack([row, col], axis=0)

    params = init_params(key, node_h, edge_h, gnn_h, u_h)

    out = stagnn_forward(params, x, edge_index, edge_attr, u, sta_num)
    jax.block_until_ready(out)
    assert out.shape == (N, gnn_h)

    ref = _ref_forward(params, x, edge_index, edge_attr, u, sta_num)
    max_err = float(jnp.max(jnp.abs(out - ref)))
    assert jnp.allclose(out, ref, rtol=1e-4, atol=1e-4), f"max abs err {max_err}"
    print("KERNEL_OK")
</pallas_src>

<mosaic_0001>
module attributes {stable_mosaic.version = 11 : i64} {
  func.func @_stagnn_kernel(%arg0: memref<16x16xf32, #tpu.memory_space<vmem>>, %arg1: memref<48x8xf32, #tpu.memory_space<vmem>>, %arg2: memref<16x4xf32, #tpu.memory_space<vmem>>, %arg3: memref<48x1xi32, #tpu.memory_space<vmem>>, %arg4: memref<48x1xi32, #tpu.memory_space<vmem>>, %arg5: memref<1x48xi32, #tpu.memory_space<vmem>>, %arg6: memref<16x32xf32, #tpu.memory_space<vmem>>, %arg7: memref<16x32xf32, #tpu.memory_space<vmem>>, %arg8: memref<8x32xf32, #tpu.memory_space<vmem>>, %arg9: memref<1x32xf32, #tpu.memory_space<vmem>>, %arg10: memref<16x32xf32, #tpu.memory_space<vmem>>, %arg11: memref<32x32xf32, #tpu.memory_space<vmem>>, %arg12: memref<4x32xf32, #tpu.memory_space<vmem>>, %arg13: memref<1x32xf32, #tpu.memory_space<vmem>>, %arg14: memref<16x32xf32, #tpu.memory_space<vmem>>) attributes {dimension_semantics = [], scalar_prefetch = 0 : i64, scratch_operands = 0 : i64, tpu.core_type = #tpu.core_type<tc>} {
    %c0 = arith.constant 0 : index
    %c0_0 = arith.constant 0 : index
    %0 = vector.load %arg0[%c0, %c0_0] : memref<16x16xf32, #tpu.memory_space<vmem>>, vector<16x16xf32>
    %c0_1 = arith.constant 0 : index
    %c0_2 = arith.constant 0 : index
    %1 = vector.load %arg6[%c0_1, %c0_2] : memref<16x32xf32, #tpu.memory_space<vmem>>, vector<16x32xf32>
    %cst = arith.constant dense<0.000000e+00> : vector<16x32xf32>
    %2 = tpu.matmul %0, %1, %cst {dimension_numbers = #tpu.dot_dimension_numbers<[1], [0], [0], [1], [0, 0, 1, 1], [], []>} : vector<16x16xf32>, vector<16x32xf32>, vector<16x32xf32> -> vector<16x32xf32>
    %c0_3 = arith.constant 0 : index
    %c0_4 = arith.constant 0 : index
    %3 = vector.load %arg7[%c0_3, %c0_4] : memref<16x32xf32, #tpu.memory_space<vmem>>, vector<16x32xf32>
    %cst_5 = arith.constant dense<0.000000e+00> : vector<16x32xf32>
    %4 = tpu.matmul %0, %3, %cst_5 {dimension_numbers = #tpu.dot_dimension_numbers<[1], [0], [0], [1], [0, 0, 1, 1], [], []>} : vector<16x16xf32>, vector<16x32xf32>, vector<16x32xf32> -> vector<16x32xf32>
    %5 = tpu.iota {dimensions = array<i32: 1>} : vector<48x16xi32>
    %c0_6 = arith.constant 0 : index
    %c0_7 = arith.constant 0 : index
    %6 = vector.load %arg3[%c0_6, %c0_7] : memref<48x1xi32, #tpu.memory_space<vmem>>, vector<48x1xi32>
    %7 = vector.broadcast %6 : vector<48x1xi32> to vector<48x16xi32>
    %8 = arith.cmpi eq, %5, %7 : vector<48x16xi32>
    %9 = arith.extui %8 : vector<48x16xi1> to vector<48x16xi32>
    %10 = arith.sitofp %9 : vector<48x16xi32> to vector<48x16xf32>
    %c0_8 = arith.constant 0 : index
    %c0_9 = arith.constant 0 : index
    %11 = vector.load %arg4[%c0_8, %c0_9] : memref<48x1xi32, #tpu.memory_space<vmem>>, vector<48x1xi32>
    %12 = vector.broadcast %11 : vector<48x1xi32> to vector<48x16xi32>
    %13 = arith.cmpi eq, %5, %12 : vector<48x16xi32>
    %14 = arith.extui %13 : vector<48x16xi1> to vector<48x16xi32>
    %15 = arith.sitofp %14 : vector<48x16xi32> to vector<48x16xf32>
    %cst_10 = arith.constant dense<0.000000e+00> : vector<48x32xf32>
    %16 = tpu.matmul %10, %2, %cst_10 {dimension_numbers = #tpu.dot_dimension_numbers<[1], [0], [0], [1], [0, 0, 1, 1], [], []>} : vector<48x16xf32>, vector<16x32xf32>, vector<48x32xf32> -> vector<48x32xf32>
    %cst_11 = arith.constant dense<0.000000e+00> : vector<48x32xf32>
    %17 = tpu.matmul %15, %4, %cst_11 {dimension_numbers = #tpu.dot_dimension_numbers<[1], [0], [0], [1], [0, 0, 1, 1], [], []>} : vector<48x16xf32>, vector<16x32xf32>, vector<48x32xf32> -> vector<48x32xf32>
    %18 = arith.addf %16, %17 : vector<48x32xf32>
    %c0_12 = arith.constant 0 : index
    %c0_13 = arith.constant 0 : index
    %19 = vector.load %arg1[%c0_12, %c0_13] : memref<48x8xf32, #tpu.memory_space<vmem>>, vector<48x8xf32>
    %c0_14 = arith.constant 0 : index
    %c0_15 = arith.constant 0 : index
    %20 = vector.load %arg8[%c0_14, %c0_15] : memref<8x32xf32, #tpu.memory_space<vmem>>, vector<8x32xf32>
    %cst_16 = arith.constant dense<0.000000e+00> : vector<48x32xf32>
    %21 = tpu.matmul %19, %20, %cst_16 {dimension_numbers = #tpu.dot_dimension_numbers<[1], [0], [0], [1], [0, 0, 1, 1], [], []>} : vector<48x8xf32>, vector<8x32xf32>, vector<48x32xf32> -> vector<48x32xf32>
    %22 = arith.addf %18, %21 : vector<48x32xf32>
    %c0_17 = arith.constant 0 : index
    %c0_18 = arith.constant 0 : index
    %23 = vector.load %arg9[%c0_17, %c0_18] : memref<1x32xf32, #tpu.memory_space<vmem>>, vector<1x32xf32>
    %24 = vector.broadcast %23 : vector<1x32xf32> to vector<48x32xf32>
    %25 = arith.addf %22, %24 : vector<48x32xf32>
    %cst_19 = arith.constant 0.000000e+00 : f32
    %26 = vector.broadcast %cst_19 : f32 to vector<48x32xf32>
    %27 = arith.cmpf ogt, %25, %26 : vector<48x32xf32>
    %cst_20 = arith.constant 0.000000e+00 : f32
    %28 = vector.broadcast %cst_20 : f32 to vector<48x32xf32>
    %29 = arith.minimumf %25, %28 : vector<48x32xf32>
    %30 = math.exp %29 : vector<48x32xf32>
    %cst_21 = arith.constant 1.000000e+00 : f32
    %31 = vector.broadcast %cst_21 : f32 to vector<48x32xf32>
    %32 = arith.subf %30, %31 : vector<48x32xf32>
    %33 = arith.select %27, %25, %32 : vector<48x32xi1>, vector<48x32xf32>
    %34 = tpu.iota {dimensions = array<i32: 0>} : vector<16x48xi32>
    %c0_22 = arith.constant 0 : index
    %c0_23 = arith.constant 0 : index
    %35 = vector.load %arg5[%c0_22, %c0_23] : memref<1x48xi32, #tpu.memory_space<vmem>>, vector<1x48xi32>
    %36 = vector.broadcast %35 : vector<1x48xi32> to vector<16x48xi32>
    %37 = arith.cmpi eq, %34, %36 : vector<16x48xi32>
    %38 = arith.extui %37 : vector<16x48xi1> to vector<16x48xi32>
    %39 = arith.sitofp %38 : vector<16x48xi32> to vector<16x48xf32>
    %cst_24 = arith.constant dense<0.000000e+00> : vector<16x32xf32>
    %40 = tpu.matmul %39, %33, %cst_24 {dimension_numbers = #tpu.dot_dimension_numbers<[1], [0], [0], [1], [0, 0, 1, 1], [], []>} : vector<16x48xf32>, vector<48x32xf32>, vector<16x32xf32> -> vector<16x32xf32>
    %cst_25 = arith.constant dense<0.000000e+00> : vector<16xf32>
    %41 = vector.multi_reduction <add>, %39, %cst_25 [1] : vector<16x48xf32> to vector<16xf32>
    %42 = vector.shape_cast %41 : vector<16xf32> to vector<16x1xf32>
    %cst_26 = arith.constant 1.000000e+00 : f32
    %43 = vector.broadcast %cst_26 : f32 to vector<16x1xf32>
    %44 = arith.maximumf %42, %43 : vector<16x1xf32>
    %45 = vector.broadcast %44 : vector<16x1xf32> to vector<16x32xf32>
    %46 = arith.divf %40, %45 : vector<16x32xf32>
    %c0_27 = arith.constant 0 : index
    %c0_28 = arith.constant 0 : index
    %47 = vector.load %arg10[%c0_27, %c0_28] : memref<16x32xf32, #tpu.memory_space<vmem>>, vector<16x32xf32>
    %cst_29 = arith.constant dense<0.000000e+00> : vector<16x32xf32>
    %48 = tpu.matmul %0, %47, %cst_29 {dimension_numbers = #tpu.dot_dimension_numbers<[1], [0], [0], [1], [0, 0, 1, 1], [], []>} : vector<16x16xf32>, vector<16x32xf32>, vector<16x32xf32> -> vector<16x32xf32>
    %c0_30 = arith.constant 0 : index
    %c0_31 = arith.constant 0 : index
    %49 = vector.load %arg11[%c0_30, %c0_31] : memref<32x32xf32, #tpu.memory_space<vmem>>, vector<32x32xf32>
    %cst_32 = arith.constant dense<0.000000e+00> : vector<16x32xf32>
    %50 = tpu.matmul %46, %49, %cst_32 {dimension_numbers = #tpu.dot_dimension_numbers<[1], [0], [0], [1], [0, 0, 1, 1], [], []>} : vector<16x32xf32>, vector<32x32xf32>, vector<16x32xf32> -> vector<16x32xf32>
    %51 = arith.addf %48, %50 : vector<16x32xf32>
    %c0_33 = arith.constant 0 : index
    %c0_34 = arith.constant 0 : index
    %52 = vector.load %arg2[%c0_33, %c0_34] : memref<16x4xf32, #tpu.memory_space<vmem>>, vector<16x4xf32>
    %c0_35 = arith.constant 0 : index
    %c0_36 = arith.constant 0 : index
    %53 = vector.load %arg12[%c0_35, %c0_36] : memref<4x32xf32, #tpu.memory_space<vmem>>, vector<4x32xf32>
    %cst_37 = arith.constant dense<0.000000e+00> : vector<16x32xf32>
    %54 = tpu.matmul %52, %53, %cst_37 {dimension_numbers = #tpu.dot_dimension_numbers<[1], [0], [0], [1], [0, 0, 1, 1], [], []>} : vector<16x4xf32>, vector<4x32xf32>, vector<16x32xf32> -> vector<16x32xf32>
    %55 = arith.addf %51, %54 : vector<16x32xf32>
    %c0_38 = arith.constant 0 : index
    %c0_39 = arith.constant 0 : index
    %56 = vector.load %arg13[%c0_38, %c0_39] : memref<1x32xf32, #tpu.memory_space<vmem>>, vector<1x32xf32>
    %57 = vector.broadcast %56 : vector<1x32xf32> to vector<16x32xf32>
    %58 = arith.addf %55, %57 : vector<16x32xf32>
    %cst_40 = arith.constant 0.000000e+00 : f32
    %59 = vector.broadcast %cst_40 : f32 to vector<16x32xf32>
    %60 = arith.cmpf ogt, %58, %59 : vector<16x32xf32>
    %cst_41 = arith.constant 0.000000e+00 : f32
    %61 = vector.broadcast %cst_41 : f32 to vector<16x32xf32>
    %62 = arith.minimumf %58, %61 : vector<16x32xf32>
    %63 = math.exp %62 : vector<16x32xf32>
    %cst_42 = arith.constant 1.000000e+00 : f32
    %64 = vector.broadcast %cst_42 : f32 to vector<16x32xf32>
    %65 = arith.subf %63, %64 : vector<16x32xf32>
    %66 = arith.select %60, %58, %65 : vector<16x32xi1>, vector<16x32xf32>
    %c0_43 = arith.constant 0 : index
    %c0_44 = arith.constant 0 : index
    %67 = vector.load %arg14[%c0_43, %c0_44] : memref<16x32xf32, #tpu.memory_space<vmem>>, vector<16x32xf32>
    tpu.vector_store %arg14[%c0_43, %c0_44], %66 {strides = array<i32>} : memref<16x32xf32, #tpu.memory_space<vmem>>, vector<16x32xf32>,
    return
  }
}

</mosaic_0001>

<llo_original>
// kernel: stagnn_forward.1
$region0: #{stagnn_forward.1}
  #allocation0 [shape = 'u32[]', space=smem, size = 0x4, offset = 0x4, fixed_abs, tag = 'smem constant byte address 0x4 - core index']
  #allocation1 [shape = 'u32[72,128]{1,0:T(1,128)}', space=vmem, size = 0x9000, scoped, tag = 'internal scratch']
  %s0 = inlined_call_operand.vmem [shape: f32[16,16], index: 0, kind: input, shape index: {}]
  %s1 = inlined_call_operand.vmem [shape: f32[48,8], index: 1, kind: input, shape index: {}]
  %s2 = inlined_call_operand.vmem [shape: f32[16,4], index: 2, kind: input, shape index: {}]
  %s3 = inlined_call_operand.vmem [shape: s32[48,1], index: 3, kind: input, shape index: {}]
  %s4 = inlined_call_operand.vmem [shape: s32[48,1], index: 4, kind: input, shape index: {}]
  %s5 = inlined_call_operand.vmem [shape: s32[1,48], index: 5, kind: input, shape index: {}]
  %s6 = inlined_call_operand.vmem [shape: f32[16,32], index: 6, kind: input, shape index: {}]
  %s7 = inlined_call_operand.vmem [shape: f32[16,32], index: 7, kind: input, shape index: {}]
  %s8 = inlined_call_operand.vmem [shape: f32[8,32], index: 8, kind: input, shape index: {}]
  %s9 = inlined_call_operand.vmem [shape: f32[1,32], index: 9, kind: input, shape index: {}]
  %s10 = inlined_call_operand.vmem [shape: f32[16,32], index: 10, kind: input, shape index: {}]
  %s11 = inlined_call_operand.vmem [shape: f32[32,32], index: 11, kind: input, shape index: {}]
  %s12 = inlined_call_operand.vmem [shape: f32[4,32], index: 12, kind: input, shape index: {}]
  %s13 = inlined_call_operand.vmem [shape: f32[1,32], index: 13, kind: input, shape index: {}]
  %s14 = inlined_call_operand.hbm [shape: f32[16,32], index: 14, kind: output, shape index: {}]
  %s15 = sld [smem:[#allocation0]]
  $region66: #{stagnn_forward.1} parent=0
    _
  %s17 = ssub.s32 1, %s15
  %s18 = scalar_select 0, %s17, %s15
  $region1: #{stagnn_forward.1} parent=0
    #allocation2 [shape = 'u8[8192]{0}', space=vmem, size = 0x2000, scoped, tag = 'output window, operand 0, single buffered']
    #allocation3 [shape = 's32[1]{0}', space=sflag, size = 0x4, scoped, tag = 'scoped memory for stagnn_forward.1']
    %19 = vsyncpa [#allocation3], 0
    // Predicated region
    $region2: #{stagnn_forward.1} parent=1 // pred_check
      _
    $region3: #{stagnn_forward.1} parent=1 // pred_check_branch
      %21 = sbr.rel (0) target = $region5
    $region4: #{stagnn_forward.1} parent=1 // pred_region
      _
    $region5: #{stagnn_forward.1} parent=1 // pred_fallthru
      _
    // Predicated region
    $region6: #{stagnn_forward.1} parent=1 // pred_check
      _
    $region7: #{stagnn_forward.1} parent=1 // pred_check_branch
      %23 = sbr.rel (0) target = $region9
    $region8: #{stagnn_forward.1} parent=1 // pred_region
      _
    $region9: #{stagnn_forward.1} parent=1 // pred_fallthru
      _
    // Predicated region
    $region10: #{stagnn_forward.1} parent=1 // pred_check
      _
    $region11: #{stagnn_forward.1} parent=1 // pred_check_branch
      %25 = sbr.rel (0) target = $region13
    $region12: #{stagnn_forward.1} parent=1 // pred_region
      _
    $region13: #{stagnn_forward.1} parent=1 // pred_fallthru
      _
    // Predicated region
    $region14: #{stagnn_forward.1} parent=1 // pred_check
      _
    $region15: #{stagnn_forward.1} parent=1 // pred_check_branch
      %27 = sbr.rel (0) target = $region17
    $region16: #{stagnn_forward.1} parent=1 // pred_region
      _
    $region17: #{stagnn_forward.1} parent=1 // pred_fallthru
      _
    // Predicated region
    $region18: #{stagnn_forward.1} parent=1 // pred_check
      _
    $region19: #{stagnn_forward.1} parent=1 // pred_check_branch
      %29 = sbr.rel (0) target = $region21
    $region20: #{stagnn_forward.1} parent=1 // pred_region
      _
    $region21: #{stagnn_forward.1} parent=1 // pred_fallthru
      _
    // Predicated region
    $region22: #{stagnn_forward.1} parent=1 // pred_check
      _
    $region23: #{stagnn_forward.1} parent=1 // pred_check_branch
      %31 = sbr.rel (0) target = $region25
    $region24: #{stagnn_forward.1} parent=1 // pred_region
      _
    $region25: #{stagnn_forward.1} parent=1 // pred_fallthru
      _
    // Predicated region
    $region26: #{stagnn_forward.1} parent=1 // pred_check
      _
    $region27: #{stagnn_forward.1} parent=1 // pred_check_branch
      %33 = sbr.rel (0) target = $region29
    $region28: #{stagnn_forward.1} parent=1 // pred_region
      _
    $region29: #{stagnn_forward.1} parent=1 // pred_fallthru
      _
    // Predicated region
    $region30: #{stagnn_forward.1} parent=1 // pred_check
      _
    $region31: #{stagnn_forward.1} parent=1 // pred_check_branch
      %35 = sbr.rel (0) target = $region33
    $region32: #{stagnn_forward.1} parent=1 // pred_region
      _
    $region33: #{stagnn_forward.1} parent=1 // pred_fallthru
      _
    // Predicated region
    $region34: #{stagnn_forward.1} parent=1 // pred_check
      _
    $region35: #{stagnn_forward.1} parent=1 // pred_check_branch
      %37 = sbr.rel (0) target = $region37
    $region36: #{stagnn_forward.1} parent=1 // pred_region
      _
    $region37: #{stagnn_forward.1} parent=1 // pred_fallthru
      _
    // Predicated region
    $region38: #{stagnn_forward.1} parent=1 // pred_check
      _
    $region39: #{stagnn_forward.1} parent=1 // pred_check_branch
      %39 = sbr.rel (0) target = $region41
    $region40: #{stagnn_forward.1} parent=1 // pred_region
      _
    $region41: #{stagnn_forward.1} parent=1 // pred_fallthru
      _
    // Predicated region
    $region42: #{stagnn_forward.1} parent=1 // pred_check
      _
    $region43: #{stagnn_forward.1} parent=1 // pred_check_branch
      %41 = sbr.rel (0) target = $region45
    $region44: #{stagnn_forward.1} parent=1 // pred_region
      _
    $region45: #{stagnn_forward.1} parent=1 // pred_fallthru
      _
    // Predicated region
    $region46: #{stagnn_forward.1} parent=1 // pred_check
      _
    $region47: #{stagnn_forward.1} parent=1 // pred_check_branch
      %43 = sbr.rel (0) target = $region49
    $region48: #{stagnn_forward.1} parent=1 // pred_region
      _
    $region49: #{stagnn_forward.1} parent=1 // pred_fallthru
      _
    // Predicated region
    $region50: #{stagnn_forward.1} parent=1 // pred_check
      _
    $region51: #{stagnn_forward.1} parent=1 // pred_check_branch
      %45 = sbr.rel (0) target = $region53
    $region52: #{stagnn_forward.1} parent=1 // pred_region
      _
    $region53: #{stagnn_forward.1} parent=1 // pred_fallthru
      _
    // Predicated region
    $region54: #{stagnn_forward.1} parent=1 // pred_check
      _
    $region55: #{stagnn_forward.1} parent=1 // pred_check_branch
      %47 = sbr.rel (0) target = $region57
    $region56: #{stagnn_forward.1} parent=1 // pred_region
      _
    $region57: #{stagnn_forward.1} parent=1 // pred_fallthru
      _
    %v48 = vld [vmem:[%s0] sm:$0xff]
    %v49 = vld [vmem:[%s0 + $0x8] sm:$0xff]
    %v50 = vld [vmem:[%s6] sm:$0xff]
    %v51 = vld [vmem:[%s6 + $0x8] sm:$0xff]
    %vm52 = vcmask 130048
    %v54 = vsel %vm52, %v48, 0
    %v57 = vsel %vm52, %v49, 0
    %59 = vmatpush.msra.mxu0 0.0
    %60 = vmatpush.msra.mxu0 0.0
    %61 = vmatpush.msra.mxu0 0.0
    %62 = vmatpush.msra.mxu0 0.0
    %63 = vmatpush.msra.mxu0 0.0
    %64 = vmatpush.msra.mxu0 0.0
    %65 = vmatpush.msra.mxu0 0.0
    %66 = vmatpush.msra.mxu0 0.0
    %67 = vmatpush.msra.mxu0 0.0
    %68 = vmatpush.msra.mxu0 0.0
    %69 = vmatpush.msra.mxu0 0.0
    %70 = vmatpush.msra.mxu0 0.0
    %71 = vmatpush.msra.mxu0 0.0
    %72 = vmatpush.msra.mxu0 0.0
    %73 = vmatpush.msra.mxu0 %v51
    %74 = vmatpush.msra.mxu0 %v50
    %75 = vmatmul.f32.gmra.mxu0 %v54
    %v76 = vpop.f32.mrf.mxu0
    %v77 = vadd.f32 0.0, %v76
    %78 = vmatmul.f32.gmra.mxu0 %v57
    %v79 = vpop.f32.mrf.mxu0
    %v80 = vadd.f32 0.0, %v79
    %81 = vdwg.mxu0
    %v82 = vld [vmem:[%s7] sm:$0xff]
    %v83 = vld [vmem:[%s7 + $0x8] sm:$0xff]
    %84 = vmatpush.msra.mxu0 0.0
    %85 = vmatpush.msra.mxu0 0.0
    %86 = vmatpush.msra.mxu0 0.0
    %87 = vmatpush.msra.mxu0 0.0
    %88 = vmatpush.msra.mxu0 0.0
    %89 = vmatpush.msra.mxu0 0.0
    %90 = vmatpush.msra.mxu0 0.0
    %91 = vmatpush.msra.mxu0 0.0
    %92 = vmatpush.msra.mxu0 0.0
    %93 = vmatpush.msra.mxu0 0.0
    %94 = vmatpush.msra.mxu0 0.0
    %95 = vmatpush.msra.mxu0 0.0
    %96 = vmatpush.msra.mxu0 0.0
    %97 = vmatpush.msra.mxu0 0.0
    %98 = vmatpush.msra.mxu0 %v83
    %99 = vmatpush.msra.mxu0 %v82
    %100 = vmatmul.f32.gmra.mxu0 %v54
    %v101 = vpop.f32.mrf.mxu0
    %v102 = vadd.f32 0.0, %v101
    %103 = vmatmul.f32.gmra.mxu0 %v57
    %v104 = vpop.f32.mrf.mxu0
    %v105 = vadd.f32 0.0, %v104
    %106 = vdwg.mxu0
    %v107 = vlaneseq
    %v108 = vand.u32 %v107, 127
    %v109 = vld [vmem:[%s3] sm:$0xff]
    %v110 = vld [vmem:[%s3 + $0x8] sm:$0xff]
    %v111 = vld [vmem:[%s3 + $0x10] sm:$0xff]
    %v112 = vld [vmem:[%s3 + $0x18] sm:$0xff]
    %v113 = vld [vmem:[%s3 + $0x20] sm:$0xff]
    %v114 = vld [vmem:[%s3 + $0x28] sm:$0xff]
    %115 = vset.pattern.permute.xlu0 0
    %116 = vperm.xlu0 %115, %v109
    %v117 = vpop.permute.xlu0 %116
    %118 = vset.pattern.permute.xlu0 0
    %119 = vperm.xlu0 %118, %v110
    %v120 = vpop.permute.xlu0 %119
    %121 = vset.pattern.permute.xlu0 0
    %122 = vperm.xlu0 %121, %v111
    %v123 = vpop.permute.xlu0 %122
    %124 = vset.pattern.permute.xlu0 0
    %125 = vperm.xlu0 %124, %v112
    %v126 = vpop.permute.xlu0 %125
    %127 = vset.pattern.permute.xlu0 0
    %128 = vperm.xlu0 %127, %v113
    %v129 = vpop.permute.xlu0 %128
    %130 = vset.pattern.permute.xlu0 0
    %131 = vperm.xlu0 %130, %v114
    %v132 = vpop.permute.xlu0 %131
    %vm133 = vcmp.eq.s32.totalorder %v108, %v117
    %vm134 = vcmp.eq.s32.totalorder %v108, %v120
    %vm135 = vcmp.eq.s32.totalorder %v108, %v123
    %vm136 = vcmp.eq.s32.totalorder %v108, %v126
    %vm137 = vcmp.eq.s32.totalorder %v108, %v129
    %vm138 = vcmp.eq.s32.totalorder %v108, %v132
    %v139 = vsel %vm133, 1, 0
    %v140 = vsel %vm134, 1, 0
    %v141 = vsel %vm135, 1, 0
    %v142 = vsel %vm136, 1, 0
    %v143 = vsel %vm137, 1, 0
    %v144 = vsel %vm138, 1, 0
    %v145 = vcvt.s32.f32 %v139
    %v146 = vcvt.s32.f32 %v140
    %v147 = vcvt.s32.f32 %v141
    %v148 = vcvt.s32.f32 %v142
    %v149 = vcvt.s32.f32 %v143
    %v150 = vcvt.s32.f32 %v144
    %v151 = vld [vmem:[%s4] sm:$0xff]
    %v152 = vld [vmem:[%s4 + $0x8] sm:$0xff]
    %v153 = vld [vmem:[%s4 + $0x10] sm:$0xff]
    %v154 = vld [vmem:[%s4 + $0x18] sm:$0xff]
    %v155 = vld [vmem:[%s4 + $0x20] sm:$0xff]
    %v156 = vld [vmem:[%s4 + $0x28] sm:$0xff]
    %157 = vset.pattern.permute.xlu0 0
    %158 = vperm.xlu0 %157, %v151
    %v159 = vpop.permute.xlu0 %158
    %160 = vset.pattern.permute.xlu0 0
    %161 = vperm.xlu0 %160, %v152
    %v162 = vpop.permute.xlu0 %161
    %163 = vset.pattern.permute.xlu0 0
    %164 = vperm.xlu0 %163, %v153
    %v165 = vpop.permute.xlu0 %164
    %166 = vset.pattern.permute.xlu0 0
    %167 = vperm.xlu0 %166, %v154
    %v168 = vpop.permute.xlu0 %167
    %169 = vset.pattern.permute.xlu0 0
    %170 = vperm.xlu0 %169, %v155
    %v171 = vpop.permute.xlu0 %170
    %172 = vset.pattern.permute.xlu0 0
    %173 = vperm.xlu0 %172, %v156
    %v174 = vpop.permute.xlu0 %173
    %vm175 = vcmp.eq.s32.totalorder %v108, %v159
    %vm176 = vcmp.eq.s32.totalorder %v108, %v162
    %vm177 = vcmp.eq.s32.totalorder %v108, %v165
    %vm178 = vcmp.eq.s32.totalorder %v108, %v168
    %vm179 = vcmp.eq.s32.totalorder %v108, %v171
    %vm180 = vcmp.eq.s32.totalorder %v108, %v174
    %v181 = vsel %vm175, 1, 0
    %v182 = vsel %vm176, 1, 0
    %v183 = vsel %vm177, 1, 0
    %v184 = vsel %vm178, 1, 0
    %v185 = vsel %vm179, 1, 0
    %v186 = vsel %vm180, 1, 0
    %v187 = vcvt.s32.f32 %v181
    %v188 = vcvt.s32.f32 %v182
    %v189 = vcvt.s32.f32 %v183
    %v190 = vcvt.s32.f32 %v184
    %v191 = vcvt.s32.f32 %v185
    %v192 = vcvt.s32.f32 %v186
    %v194 = vsel %vm52, %v187, 0
    %v197 = vsel %vm52, %v188, 0
    %v200 = vsel %vm52, %v189, 0
    %v203 = vsel %vm52, %v190, 0
    %v206 = vsel %vm52, %v191, 0
    %v209 = vsel %vm52, %v192, 0
    %211 = vmatpush.msra.mxu0 0.0
    %212 = vmatpush.msra.mxu0 0.0
    %213 = vmatpush.msra.mxu0 0.0
    %214 = vmatpush.msra.mxu0 0.0
    %215 = vmatpush.msra.mxu0 0.0
    %216 = vmatpush.msra.mxu0 0.0
    %217 = vmatpush.msra.mxu0 0.0
    %218 = vmatpush.msra.mxu0 0.0
    %219 = vmatpush.msra.mxu0 0.0
    %220 = vmatpush.msra.mxu0 0.0
    %221 = vmatpush.msra.mxu0 0.0
    %222 = vmatpush.msra.mxu0 0.0
    %223 = vmatpush.msra.mxu0 0.0
    %224 = vmatpush.msra.mxu0 0.0
    %225 = vmatpush.msra.mxu0 %v105
    %226 = vmatpush.msra.mxu0 %v102
    %227 = vmatmul.f32.gmra.mxu0 %v194
    %v228 = vpop.f32.mrf.mxu0
    %v229 = vadd.f32 0.0, %v228
    %230 = vmatmul.f32.gmra.mxu0 %v197
    %v231 = vpop.f32.mrf.mxu0
    %v232 = vadd.f32 0.0, %v231
    %233 = vmatmul.f32.gmra.mxu0 %v200
    %v234 = vpop.f32.mrf.mxu0
    %v235 = vadd.f32 0.0, %v234
    %236 = vmatmul.f32.gmra.mxu0 %v203
    %v237 = vpop.f32.mrf.mxu0
    %v238 = vadd.f32 0.0, %v237
    %239 = vmatmul.f32.gmra.mxu0 %v206
    %v240 = vpop.f32.mrf.mxu0
    %v241 = vadd.f32 0.0, %v240
    %242 = vmatmul.f32.gmra.mxu0 %v209
    %v243 = vpop.f32.mrf.mxu0
    %v244 = vadd.f32 0.0, %v243
    %245 = vdwg.mxu0
    %v247 = vsel %vm52, %v145, 0
    %v250 = vsel %vm52, %v146, 0
    %v253 = vsel %vm52, %v147, 0
    %v256 = vsel %vm52, %v148, 0
    %v259 = vsel %vm52, %v149, 0
    %v262 = vsel %vm52, %v150, 0
    %264 = vmatpush.msra.mxu0 0.0
    %265 = vmatpush.msra.mxu0 0.0
    %266 = vmatpush.msra.mxu0 0.0
    %267 = vmatpush.msra.mxu0 0.0
    %268 = vmatpush.msra.mxu0 0.0
    %269 = vmatpush.msra.mxu0 0.0
    %270 = vmatpush.msra.mxu0 0.0
    %271 = vmatpush.msra.mxu0 0.0
    %272 = vmatpush.msra.mxu0 0.0
    %273 = vmatpush.msra.mxu0 0.0
    %274 = vmatpush.msra.mxu0 0.0
    %275 = vmatpush.msra.mxu0 0.0
    %276 = vmatpush.msra.mxu0 0.0
    %277 = vmatpush.msra.mxu0 0.0
    %278 = vmatpush.msra.mxu0 %v80
    %279 = vmatpush.msra.mxu0 %v77
    %280 = vmatmul.f32.gmra.mxu0 %v247
    %v281 = vpop.f32.mrf.mxu0
    %v282 = vadd.f32 %v229, %v281
    %283 = vmatmul.f32.gmra.mxu0 %v250
    %v284 = vpop.f32.mrf.mxu0
    %v285 = vadd.f32 %v232, %v284
    %286 = vmatmul.f32.gmra.mxu0 %v253
    %v287 = vpop.f32.mrf.mxu0
    %v288 = vadd.f32 %v235, %v287
    %289 = vmatmul.f32.gmra.mxu0 %v256
    %v290 = vpop.f32.mrf.mxu0
    %v291 = vadd.f32 %v238, %v290
    %292 = vmatmul.f32.gmra.mxu0 %v259
    %v293 = vpop.f32.mrf.mxu0
    %v294 = vadd.f32 %v241, %v293
    %295 = vmatmul.f32.gmra.mxu0 %v262
    %v296 = vpop.f32.mrf.mxu0
    %v297 = vadd.f32 %v244, %v296
    %298 = vdwg.mxu0
    %v299 = vld [vmem:[%s1] sm:$0xff]
    %v300 = vld [vmem:[%s1 + $0x8] sm:$0xff]
    %v301 = vld [vmem:[%s1 + $0x10] sm:$0xff]
    %v302 = vld [vmem:[%s1 + $0x18] sm:$0xff]
    %v303 = vld [vmem:[%s1 + $0x20] sm:$0xff]
    %v304 = vld [vmem:[%s1 + $0x28] sm:$0xff]
    %v305 = vld [vmem:[%s8] sm:$0xff]
    %vm306 = vcmask 64512
    %v308 = vsel %vm306, %v299, 0
    %v311 = vsel %vm306, %v300, 0
    %v314 = vsel %vm306, %v301, 0
    %v317 = vsel %vm306, %v302, 0
    %v320 = vsel %vm306, %v303, 0
    %v323 = vsel %vm306, %v304, 0
    %325 = vmatpush.msra.mxu0 0.0
    %326 = vmatpush.msra.mxu0 0.0
    %327 = vmatpush.msra.mxu0 0.0
    %328 = vmatpush.msra.mxu0 0.0
    %329 = vmatpush.msra.mxu0 0.0
    %330 = vmatpush.msra.mxu0 0.0
    %331 = vmatpush.msra.mxu0 0.0
    %332 = vmatpush.msra.mxu0 0.0
    %333 = vmatpush.msra.mxu0 0.0
    %334 = vmatpush.msra.mxu0 0.0
    %335 = vmatpush.msra.mxu0 0.0
    %336 = vmatpush.msra.mxu0 0.0
    %337 = vmatpush.msra.mxu0 0.0
    %338 = vmatpush.msra.mxu0 0.0
    %339 = vmatpush.msra.mxu0 0.0
    %340 = vmatpush.msra.mxu0 %v305
    %341 = vmatmul.f32.gmra.mxu0 %v308
    %v342 = vpop.f32.mrf.mxu0
    %v343 = vadd.f32 0.0, %v342
    %344 = vmatmul.f32.gmra.mxu0 %v311
    %v345 = vpop.f32.mrf.mxu0
    %v346 = vadd.f32 0.0, %v345
    %347 = vmatmul.f32.gmra.mxu0 %v314
    %v348 = vpop.f32.mrf.mxu0
    %v349 = vadd.f32 0.0, %v348
    %350 = vmatmul.f32.gmra.mxu0 %v317
    %v351 = vpop.f32.mrf.mxu0
    %v352 = vadd.f32 0.0, %v351
    %353 = vmatmul.f32.gmra.mxu0 %v320
    %v354 = vpop.f32.mrf.mxu0
    %v355 = vadd.f32 0.0, %v354
    %356 = vmatmul.f32.gmra.mxu0 %v323
    %v357 = vpop.f32.mrf.mxu0
    %v358 = vadd.f32 0.0, %v357
    %359 = vdwg.mxu0
    %v360 = vadd.f32 %v282, %v343
    %v361 = vadd.f32 %v285, %v346
    %v362 = vadd.f32 %v288, %v349
    %v363 = vadd.f32 %v291, %v352
    %v364 = vadd.f32 %v294, %v355
    %v365 = vadd.f32 %v297, %v358
    %v366 = vld [vmem:[%s9] sm:$0x1]
    %v368 = vperm.slane %v366, 0
    %v370 = vadd.f32 %v360, %v368
    %v371 = vadd.f32 %v361, %v368
    %v372 = vadd.f32 %v362, %v368
    %v373 = vadd.f32 %v363, %v368
    %v374 = vadd.f32 %v364, %v368
    %v375 = vadd.f32 %v365, %v368
    %vm376 = vcmp.gt.f32.partialorder %v370, 0.0
    %vm377 = vcmp.gt.f32.partialorder %v371, 0.0
    %vm378 = vcmp.gt.f32.partialorder %v372, 0.0
    %vm379 = vcmp.gt.f32.partialorder %v373, 0.0
    %vm380 = vcmp.gt.f32.partialorder %v374, 0.0
    %vm381 = vcmp.gt.f32.partialorder %v375, 0.0
    %v382 = vmin.f32 %v370, 0.0
    %v383 = vmin.f32 %v371, 0.0
    %v384 = vmin.f32 %v372, 0.0
    %v385 = vmin.f32 %v373, 0.0
    %v386 = vmin.f32 %v374, 0.0
    %v387 = vmin.f32 %v375, 0.0
    %v388 = vmul.f32 %v382, 1.442695
    %v389 = vpow.pop %v388
    %v390 = vmul.f32 %v383, 1.442695
    %v391 = vpow.pop %v390
    %v392 = vmul.f32 %v384, 1.442695
    %v393 = vpow.pop %v392
    %v394 = vmul.f32 %v385, 1.442695
    %v395 = vpow.pop %v394
    %v396 = vmul.f32 %v386, 1.442695
    %v397 = vpow.pop %v396
    %v398 = vmul.f32 %v387, 1.442695
    %v399 = vpow.pop %v398
    %v400 = vsub.f32 %v389, 1.0
    %v401 = vsub.f32 %v391, 1.0
    %v402 = vsub.f32 %v393, 1.0
    %v403 = vsub.f32 %v395, 1.0
    %v404 = vsub.f32 %v397, 1.0
    %v405 = vsub.f32 %v399, 1.0
    %v406 = vsel %vm376, %v370, %v400
    %v407 = vsel %vm377, %v371, %v401
    %v408 = vsel %vm378, %v372, %v402
    %v409 = vsel %vm379, %v373, %v403
    %v410 = vsel %vm380, %v374, %v404
    %v411 = vsel %vm381, %v375, %v405
    %v412 = vlaneseq
    %v413 = vshrl.u32 %v412, 7
    %v414 = vadd.s32 %v413, 8
    %v415 = vld [vmem:[%s5] sm:$0x1]
    %v416 = vperm.slane %v415, 0
    %vm417 = vcmp.eq.s32.totalorder %v413, %v416
    %vm418 = vcmp.eq.s32.totalorder %v414, %v416
    %v419 = vsel %vm417, 1, 0
    %v420 = vsel %vm418, 1, 0
    %v421 = vcvt.s32.f32 %v419
    %v422 = vcvt.s32.f32 %v420
    %vm423 = vcmask 392192
    %v425 = vsel %vm423, %v421, 0
    %v428 = vsel %vm423, %v422, 0
    %430 = vmatpush.msra.mxu0 0.0
    %431 = vmatpush.msra.mxu0 0.0
    %432 = vmatpush.msra.mxu0 0.0
    %433 = vmatpush.msra.mxu0 0.0
    %434 = vmatpush.msra.mxu0 0.0
    %435 = vmatpush.msra.mxu0 0.0
    %436 = vmatpush.msra.mxu0 0.0
    %437 = vmatpush.msra.mxu0 0.0
    %438 = vmatpush.msra.mxu0 0.0
    %439 = vmatpush.msra.mxu0 0.0
    %440 = vmatpush.msra.mxu0 %v411
    %441 = vmatpush.msra.mxu0 %v410
    %442 = vmatpush.msra.mxu0 %v409
    %443 = vmatpush.msra.mxu0 %v408
    %444 = vmatpush.msra.mxu0 %v407
    %445 = vmatpush.msra.mxu0 %v406
    %446 = vmatmul.f32.gmra.mxu0 %v425
    %v447 = vpop.f32.mrf.mxu0
    %v448 = vadd.f32 0.0, %v447
    %449 = vmatmul.f32.gmra.mxu0 %v428
    %v450 = vpop.f32.mrf.mxu0
    %v451 = vadd.f32 0.0, %v450
    %452 = vdwg.mxu0
    %v453 = vsel %vm423, %v421, 0.0
    %454 = vadd.xlane.f32.xlu0 %v453
    %v455 = vpop.xlane.xlu0 %454
    %v456 = vsel %vm423, %v422, 0.0
    %457 = vadd.xlane.f32.xlu0 %v456
    %v458 = vpop.xlane.xlu0 %457
    %v459 = vmax.f32 %v455, 1.0
    %v460 = vmax.f32 %v458, 1.0
    %v461 = vrcp.pop %v459
    %v462 = vmul.f32 %v459, %v461
    %v463 = vsub.f32 1.0, %v462
    %v464 = vmul.f32 %v461, %v463
    %v465 = vadd.f32 %v461, %v464
    %vm466 = vweird.f32 %v459
    %vm467 = vweird.f32 %v461
    %vm468 = vmor %vm466, %vm467
    %v469 = vsel %vm468, %v461, %v465
    %v470 = vand.u32 2147483647, %v459
    %vm471 = vcmp.eq.f32.partialorder %v470, 8.507059e+37
    %v472 = vand.u32 %v459, 2147483648
    %v473 = vor.u32 1.1754944e-38, %v472
    %v474 = vsel %vm471, %v473, %v469
    %v475 = vmul.f32 %v448, %v474
    %v476 = vrcp.pop %v460
    %v477 = vmul.f32 %v460, %v476
    %v478 = vsub.f32 1.0, %v477
    %v479 = vmul.f32 %v476, %v478
    %v480 = vadd.f32 %v476, %v479
    %vm481 = vweird.f32 %v460
    %vm482 = vweird.f32 %v476
    %vm483 = vmor %vm481, %vm482
    %v484 = vsel %vm483, %v476, %v480
    %v485 = vand.u32 2147483647, %v460
    %vm486 = vcmp.eq.f32.partialorder %v485, 8.507059e+37
    %v487 = vand.u32 %v460, 2147483648
    %v488 = vor.u32 1.1754944e-38, %v487
    %v489 = vsel %vm486, %v488, %v484
    %v490 = vmul.f32 %v451, %v489
    %v491 = vld [vmem:[%s10] sm:$0xff]
    %v492 = vld [vmem:[%s10 + $0x8] sm:$0xff]
    %v493 = vld [vmem:[%s11] sm:$0xff]
    %v494 = vld [vmem:[%s11 + $0x8] sm:$0xff]
    %v495 = vld [vmem:[%s11 + $0x10] sm:$0xff]
    %v496 = vld [vmem:[%s11 + $0x18] sm:$0xff]
    %vm497 = vcmask 261120
    %v499 = vsel %vm497, %v475, 0
    %v502 = vsel %vm497, %v490, 0
    %504 = vmatpush.msra.mxu0 0.0
    %505 = vmatpush.msra.mxu0 0.0
    %506 = vmatpush.msra.mxu0 0.0
    %507 = vmatpush.msra.mxu0 0.0
    %508 = vmatpush.msra.mxu0 0.0
    %509 = vmatpush.msra.mxu0 0.0
    %510 = vmatpush.msra.mxu0 0.0
    %511 = vmatpush.msra.mxu0 0.0
    %512 = vmatpush.msra.mxu0 0.0
    %513 = vmatpush.msra.mxu0 0.0
    %514 = vmatpush.msra.mxu0 0.0
    %515 = vmatpush.msra.mxu0 0.0
    %516 = vmatpush.msra.mxu0 %v496
    %517 = vmatpush.msra.mxu0 %v495
    %518 = vmatpush.msra.mxu0 %v494
    %519 = vmatpush.msra.mxu0 %v493
    %520 = vmatmul.f32.gmra.mxu0 %v499
    %v521 = vpop.f32.mrf.mxu0
    %v522 = vadd.f32 0.0, %v521
    %523 = vmatmul.f32.gmra.mxu0 %v502
    %v524 = vpop.f32.mrf.mxu0
    %v525 = vadd.f32 0.0, %v524
    %526 = vdwg.mxu0
    %527 = vmatpush.msra.mxu0 0.0
    %528 = vmatpush.msra.mxu0 0.0
    %529 = vmatpush.msra.mxu0 0.0
    %530 = vmatpush.msra.mxu0 0.0
    %531 = vmatpush.msra.mxu0 0.0
    %532 = vmatpush.msra.mxu0 0.0
    %533 = vmatpush.msra.mxu0 0.0
    %534 = vmatpush.msra.mxu0 0.0
    %535 = vmatpush.msra.mxu0 0.0
    %536 = vmatpush.msra.mxu0 0.0
    %537 = vmatpush.msra.mxu0 0.0
    %538 = vmatpush.msra.mxu0 0.0
    %539 = vmatpush.msra.mxu0 0.0
    %540 = vmatpush.msra.mxu0 0.0
    %541 = vmatpush.msra.mxu0 %v492
    %542 = vmatpush.msra.mxu0 %v491
    %543 = vmatmul.f32.gmra.mxu0 %v54
    %v544 = vpop.f32.mrf.mxu0
    %v545 = vadd.f32 %v522, %v544
    %546 = vmatmul.f32.gmra.mxu0 %v57
    %v547 = vpop.f32.mrf.mxu0
    %v548 = vadd.f32 %v525, %v547
    %549 = vdwg.mxu0
    %v550 = vld [vmem:[%s2] sm:$0xff]
    %v551 = vld [vmem:[%s2 + $0x8] sm:$0xff]
    %v552 = vld [vmem:[%s12] sm:$0xf]
    %vm553 = vcmask 31744
    %v555 = vsel %vm553, %v550, 0
    %v558 = vsel %vm553, %v551, 0
    %vm560 = vcmask 1043456
    %v562 = vsel %vm560, %v552, 0
    %564 = vmatpush.msra.mxu0 0.0
    %565 = vmatpush.msra.mxu0 0.0
    %566 = vmatpush.msra.mxu0 0.0
    %567 = vmatpush.msra.mxu0 0.0
    %568 = vmatpush.msra.mxu0 0.0
    %569 = vmatpush.msra.mxu0 0.0
    %570 = vmatpush.msra.mxu0 0.0
    %571 = vmatpush.msra.mxu0 0.0
    %572 = vmatpush.msra.mxu0 0.0
    %573 = vmatpush.msra.mxu0 0.0
    %574 = vmatpush.msra.mxu0 0.0
    %575 = vmatpush.msra.mxu0 0.0
    %576 = vmatpush.msra.mxu0 0.0
    %577 = vmatpush.msra.mxu0 0.0
    %578 = vmatpush.msra.mxu0 0.0
    %579 = vmatpush.msra.mxu0 %v562
    %580 = vmatmul.f32.gmra.mxu0 %v555
    %v581 = vpop.f32.mrf.mxu0
    %v582 = vadd.f32 0.0, %v581
    %583 = vmatmul.f32.gmra.mxu0 %v558
    %v584 = vpop.f32.mrf.mxu0
    %v585 = vadd.f32 0.0, %v584
    %586 = vdwg.mxu0
    %v587 = vadd.f32 %v545, %v582
    %v588 = vadd.f32 %v548, %v585
    %v589 = vld [vmem:[%s13] sm:$0x1]
    %v591 = vperm.slane %v589, 0
    %v593 = vadd.f32 %v587, %v591
    %v594 = vadd.f32 %v588, %v591
    %vm595 = vcmp.gt.f32.partialorder %v593, 0.0
    %vm596 = vcmp.gt.f32.partialorder %v594, 0.0
    %v597 = vmin.f32 %v593, 0.0
    %v598 = vmin.f32 %v594, 0.0
    %v599 = vmul.f32 %v597, 1.442695
    %v600 = vpow.pop %v599
    %v601 = vmul.f32 %v598, 1.442695
    %v602 = vpow.pop %v601
    %v603 = vsub.f32 %v600, 1.0
    %v604 = vsub.f32 %v602, 1.0
    %v605 = vsel %vm595, %v593, %v603
    %v606 = vsel %vm596, %v594, %v604
    %607 = vst.msk [vmem:[#allocation2] sm:$0xff] %vm497, %v605
    %608 = vst.msk [vmem:[#allocation2 + $0x8] sm:$0xff] %vm497, %v606
    // Predicated region
    $region58: #{stagnn_forward.1} parent=1 // pred_check
      _
    $region59: #{stagnn_forward.1} parent=1 // pred_check_branch
      %610 = sbr.rel (0) target = $region61
    $region60: #{stagnn_forward.1} parent=1 // pred_region
      %612 = vsyncadd [#allocation3], 0
      %s613 = sshll.u32 [#allocation2], 4
      %s614 = int_to_ptr.vmem [resolvable:$true] %s613
      %s615 = sshll.u32 %s14, 4
      %s616 = int_to_ptr.hbm [resolvable:$true] %s615
      %621 = dma.vmem_to_hbm [thread:$0]  %s614, 256, %s616, [#allocation3], 128, 128, 8
    $region61: #{stagnn_forward.1} parent=1 // pred_fallthru
      _
    // Predicated region
    $region62: #{stagnn_forward.1} parent=1 // pred_check
      _
    $region63: #{stagnn_forward.1} parent=1 // pred_check_branch
      %623 = sbr.rel (0) target = $region65
    $region64: #{stagnn_forward.1} parent=1 // pred_region
      %625 = dma.done [#allocation3], 256
    $region65: #{stagnn_forward.1} parent=1 // pred_fallthru
      _
    %626 = vsyncpa [#allocation3], 1

</llo_original>
